<compile_context>
chip_gen: v7x
topology: tpu7x:2x2x1
jax: 0.10.0
libtpu: 0.0.40
codegen_flags: <defaults>
</compile_context>

<pallas_src>
import functools

import jax
import jax.numpy as jnp
from jax import lax
from jax.experimental import pallas as pl
from jax.experimental.pallas import tpu as pltpu


def _round_up(x, m):
    return ((x + m - 1) // m) * m


def _selective_linear_kernel(x_ref, w_ref, o_ref, acc_ref, *, tn):
    # x_ref  : (tm, tk)      token tile, native dtype
    # w_ref  : (tk, 2*tn)    fused [proj_j | reweight_j] weight tile, native dtype
    # o_ref  : (tm, tn)      output tile
    # acc_ref: (tm, 2*tn)    f32 accumulator scratch (resident across K)
    k = pl.program_id(2)

    @pl.when(k == 0)
    def _():
        acc_ref[...] = jnp.zeros_like(acc_ref)

    # Single fused MXU matmul, f32 accumulation, no operand upcast.
    acc_ref[...] += jnp.dot(x_ref[...], w_ref[...],
                            preferred_element_type=jnp.float32)

    @pl.when(k == pl.num_programs(2) - 1)
    def _():
        acc = acc_ref[...]
        u = acc[:, :tn]          # proj half   (lane-aligned split, tn % 128 == 0)
        v = acc[:, tn:]          # reweight half
        # Exact (erf-based) GELU to match torch.nn.GELU() default.
        g = 0.5 * u * (1.0 + lax.erf(u * jnp.float32(0.7071067811865476)))
        # Sigmoid via tanh: one EUP transcendental instead of exp + divide.
        s = 0.5 * (jnp.tanh(0.5 * v) + 1.0)
        o_ref[...] = (g * s).astype(o_ref.dtype)


def selective_linear(x, w_proj, w_reweight, *, tm=256, tn=256, tk=512):
    """x: (..., in_dim); w_proj, w_reweight: (out_dim, in_dim) (PyTorch layout)."""
    in_dim = x.shape[-1]
    out_dim = w_proj.shape[0]
    lead_shape = x.shape[:-1]

    x2d = x.reshape(-1, in_dim)
    M = x2d.shape[0]

    # ---- effective tile sizes --------------------------------------------
    # Rows: multiple of 8 sublanes; shrink for tiny M.
    tm_e = min(tm, _round_up(M, 8))
    Mp = _round_up(M, tm_e)
    # Output columns: lane-dense, multiple of 128.
    tn_e = min(tn, _round_up(out_dim, 128))
    Np = _round_up(out_dim, tn_e)
    # Contraction: keep full K when small, otherwise tile by tk (mult. of 128).
    if in_dim <= tk:
        tk_e = in_dim
        Kp = in_dim
    else:
        tk_e = tk
        Kp = _round_up(in_dim, tk_e)

    # ---- pad operands (zero padding along K is exact for the matmul) -------
    if Mp != M or Kp != in_dim:
        x2d = jnp.pad(x2d, ((0, Mp - M), (0, Kp - in_dim)))

    def _prep(w):
        wt = w.T  # (in_dim, out_dim)
        if Kp != in_dim or Np != out_dim:
            wt = jnp.pad(wt, ((0, Kp - in_dim), (0, Np - out_dim)))
        return wt

    wp_t = _prep(w_proj)
    wr_t = _prep(w_reweight)
    n_tiles = Np // tn_e
    # Interleave per N-tile so that column block j = [proj_j | reweight_j].
    w_fused = jnp.stack(
        [wp_t.reshape(Kp, n_tiles, tn_e), wr_t.reshape(Kp, n_tiles, tn_e)],
        axis=2,
    ).reshape(Kp, 2 * Np)

    grid = (Mp // tm_e, n_tiles, Kp // tk_e)

    # VMEM budget: double-buffered x/w/out tiles + f32 accumulator + headroom.
    x_b = jnp.dtype(x.dtype).itemsize
    w_b = jnp.dtype(w_fused.dtype).itemsize
    need = (2 * tm_e * tk_e * x_b
            + 2 * tk_e * 2 * tn_e * w_b
            + 2 * tm_e * tn_e * x_b
            + tm_e * 2 * tn_e * 4)
    vmem_limit = min(max(2 * need, 32 << 20), 64 << 20)

    kernel = functools.partial(_selective_linear_kernel, tn=tn_e)

    outp = pl.pallas_call(
        kernel,
        out_shape=jax.ShapeDtypeStruct((Mp, Np), x.dtype),
        grid_spec=pltpu.PrefetchScalarGridSpec(
            num_scalar_prefetch=0,
            grid=grid,
            in_specs=[
                pl.BlockSpec((tm_e, tk_e), lambda i, j, k: (i, k)),       # x tile
                pl.BlockSpec((tk_e, 2 * tn_e), lambda i, j, k: (k, j)),   # fused W tile
            ],
            out_specs=pl.BlockSpec((tm_e, tn_e), lambda i, j, k: (i, j)),
            scratch_shapes=[pltpu.VMEM((tm_e, 2 * tn_e), jnp.float32)],
        ),
        compiler_params=pltpu.CompilerParams(
            dimension_semantics=("parallel", "parallel", "arbitrary"),
            vmem_limit_bytes=vmem_limit,
        ),
    )(x2d, w_fused)

    out = outp[:M, :out_dim]
    return out.reshape(*lead_shape, out_dim)


def _reference(x, w_proj, w_reweight):
    u = x @ w_proj.T
    u = 0.5 * u * (1.0 + lax.erf(u * 0.7071067811865476))
    v = jax.nn.sigmoid(x @ w_reweight.T)
    return u * v


if __name__ == "__main__":
    key = jax.random.PRNGKey(0)

    # --- small shapes consistent with the module ---------------------------
    batch, seq, in_dim, out_dim = 2, 8, 32, 32
    kx, kp, kr, k2 = jax.random.split(key, 4)

    x = jax.random.normal(kx, (batch, seq, in_dim), dtype=jnp.float32)
    # Mirrors reset_parameters(): uniform(-0.5, 0.5), PyTorch (out_dim, in_dim) layout.
    w_proj = jax.random.uniform(kp, (out_dim, in_dim), jnp.float32, -0.5, 0.5)
    w_reweight = jax.random.uniform(kr, (out_dim, in_dim), jnp.float32, -0.5, 0.5)

    out = selective_linear(x, w_proj, w_reweight)
    jax.block_until_ready(out)
    assert out.shape == (batch, seq, out_dim)
    assert jnp.max(jnp.abs(out - _reference(x, w_proj, w_reweight))) < 1e-4

    # --- second config: non-divisible M, multiple N tiles, padding path -----
    b2, s2, in2, out2 = 2, 150, 64, 256
    ka, kb, kc = jax.random.split(k2, 3)
    x2 = jax.random.normal(ka, (b2, s2, in2), dtype=jnp.float32)
    wp2 = jax.random.uniform(kb, (out2, in2), jnp.float32, -0.5, 0.5)
    wr2 = jax.random.uniform(kc, (out2, in2), jnp.float32, -0.5, 0.5)

    out2_arr = selective_linear(x2, wp2, wr2, tm=128, tn=128)
    jax.block_until_ready(out2_arr)
    assert out2_arr.shape == (b2, s2, out2)
    assert jnp.max(jnp.abs(out2_arr - _reference(x2, wp2, wr2))) < 1e-4

    print("KERNEL_OK")
</pallas_src>

<mosaic_0001>
module attributes {stable_mosaic.version = 11 : i64} {
  func.func @_selective_linear_kernel(%arg0: i32, %arg1: i32, %arg2: i32, %arg3: memref<16x32xf32, #tpu.memory_space<vmem>>, %arg4: memref<32x256xf32, #tpu.memory_space<vmem>>, %arg5: memref<16x128xf32, #tpu.memory_space<vmem>>, %arg6: memref<16x256xf32, #tpu.memory_space<vmem>>) attributes {dimension_semantics = [#tpu.dimension_semantics<parallel>, #tpu.dimension_semantics<parallel>, #tpu.dimension_semantics<arbitrary>], iteration_bounds = array<i64: 1, 1, 1>, scalar_prefetch = 0 : i64, scratch_operands = 1 : i64, tpu.core_type = #tpu.core_type<tc>, window_params = [{transform_indices = @transform_0, window_bounds = array<i64: 16, 32>}, {transform_indices = @transform_1, window_bounds = array<i64: 32, 256>}, {transform_indices = @transform_2, window_bounds = array<i64: 16, 128>}]} {
    %c0_i32 = arith.constant 0 : i32
    %0 = arith.cmpi eq, %arg2, %c0_i32 : i32
    %1 = arith.extui %0 : i1 to i32
    %c0_i32_0 = arith.constant 0 : i32
    %2 = arith.cmpi ne, %1, %c0_i32_0 : i32
    scf.if %2 {
      %cst_10 = arith.constant 0.000000e+00 : f32
      %12 = vector.broadcast %cst_10 : f32 to vector<16x256xf32>
      %c0_11 = arith.constant 0 : index
      %c0_12 = arith.constant 0 : index
      %13 = vector.load %arg6[%c0_11, %c0_12] : memref<16x256xf32, #tpu.memory_space<vmem>>, vector<16x256xf32>
      tpu.vector_store %arg6[%c0_11, %c0_12], %12 {strides = array<i32>} : memref<16x256xf32, #tpu.memory_space<vmem>>, vector<16x256xf32>,
    } else {
    }
    %c0 = arith.constant 0 : index
    %c0_1 = arith.constant 0 : index
    %3 = vector.load %arg6[%c0, %c0_1] : memref<16x256xf32, #tpu.memory_space<vmem>>, vector<16x256xf32>
    %c0_2 = arith.constant 0 : index
    %c0_3 = arith.constant 0 : index
    %4 = vector.load %arg3[%c0_2, %c0_3] : memref<16x32xf32, #tpu.memory_space<vmem>>, vector<16x32xf32>
    %c0_4 = arith.constant 0 : index
    %c0_5 = arith.constant 0 : index
    %5 = vector.load %arg4[%c0_4, %c0_5] : memref<32x256xf32, #tpu.memory_space<vmem>>, vector<32x256xf32>
    %cst = arith.constant dense<0.000000e+00> : vector<16x256xf32>
    %6 = tpu.matmul %4, %5, %cst {dimension_numbers = #tpu.dot_dimension_numbers<[1], [0], [0], [1], [0, 0, 1, 1], [], []>} : vector<16x32xf32>, vector<32x256xf32>, vector<16x256xf32> -> vector<16x256xf32>
    %7 = arith.addf %3, %6 : vector<16x256xf32>
    %c0_6 = arith.constant 0 : index
    %c0_7 = arith.constant 0 : index
    %8 = vector.load %arg6[%c0_6, %c0_7] : memref<16x256xf32, #tpu.memory_space<vmem>>, vector<16x256xf32>
    tpu.vector_store %arg6[%c0_6, %c0_7], %7 {strides = array<i32>} : memref<16x256xf32, #tpu.memory_space<vmem>>, vector<16x256xf32>,
    %c0_i32_8 = arith.constant 0 : i32
    %9 = arith.cmpi eq, %arg2, %c0_i32_8 : i32
    %10 = arith.extui %9 : i1 to i32
    %c0_i32_9 = arith.constant 0 : i32
    %11 = arith.cmpi ne, %10, %c0_i32_9 : i32
    scf.if %11 {
      %c0_10 = arith.constant 0 : index
      %c0_11 = arith.constant 0 : index
      %12 = vector.load %arg6[%c0_10, %c0_11] : memref<16x256xf32, #tpu.memory_space<vmem>>, vector<16x256xf32>
      %13 = vector.extract_strided_slice %12 {offsets = [0, 0], sizes = [16, 128], strides = [1, 1]} : vector<16x256xf32> to vector<16x128xf32>
      %14 = vector.extract_strided_slice %12 {offsets = [0, 128], sizes = [16, 128], strides = [1, 1]} : vector<16x256xf32> to vector<16x128xf32>
      %cst_12 = arith.constant 5.000000e-01 : f32
      %15 = vector.broadcast %cst_12 : f32 to vector<16x128xf32>
      %16 = arith.mulf %15, %13 : vector<16x128xf32>
      %cst_13 = arith.constant 0.707106769 : f32
      %17 = vector.broadcast %cst_13 : f32 to vector<16x128xf32>
      %18 = arith.mulf %13, %17 : vector<16x128xf32>
      %19 = math.erf %18 : vector<16x128xf32>
      %cst_14 = arith.constant 1.000000e+00 : f32
      %20 = vector.broadcast %cst_14 : f32 to vector<16x128xf32>
      %21 = arith.addf %20, %19 : vector<16x128xf32>
      %22 = arith.mulf %16, %21 : vector<16x128xf32>
      %cst_15 = arith.constant 5.000000e-01 : f32
      %23 = vector.broadcast %cst_15 : f32 to vector<16x128xf32>
      %24 = arith.mulf %23, %14 : vector<16x128xf32>
      %25 = math.tanh %24 : vector<16x128xf32>
      %cst_16 = arith.constant 1.000000e+00 : f32
      %26 = vector.broadcast %cst_16 : f32 to vector<16x128xf32>
      %27 = arith.addf %25, %26 : vector<16x128xf32>
      %cst_17 = arith.constant 5.000000e-01 : f32
      %28 = vector.broadcast %cst_17 : f32 to vector<16x128xf32>
      %29 = arith.mulf %28, %27 : vector<16x128xf32>
      %30 = arith.mulf %22, %29 : vector<16x128xf32>
      %c0_18 = arith.constant 0 : index
      %c0_19 = arith.constant 0 : index
      %31 = vector.load %arg5[%c0_18, %c0_19] : memref<16x128xf32, #tpu.memory_space<vmem>>, vector<16x128xf32>
      tpu.vector_store %arg5[%c0_18, %c0_19], %30 {strides = array<i32>} : memref<16x128xf32, #tpu.memory_space<vmem>>, vector<16x128xf32>,
    } else {
    }
    return
  }
  func.func @transform_0(%arg0: i32, %arg1: i32, %arg2: i32) -> (i32, i32) {
    %c0_i32 = arith.constant 0 : i32
    return %arg0, %arg2 : i32, i32
  }
  func.func @transform_1(%arg0: i32, %arg1: i32, %arg2: i32) -> (i32, i32) {
    %c0_i32 = arith.constant 0 : i32
    return %arg2, %arg1 : i32, i32
  }
  func.func @transform_2(%arg0: i32, %arg1: i32, %arg2: i32) -> (i32, i32) {
    %c0_i32 = arith.constant 0 : i32
    return %arg0, %arg1 : i32, i32
  }
}

</mosaic_0001>

<llo_original>
// kernel: tpu_custom_call.1
$region0: #{tpu_custom_call.1}
  #allocation0 [shape = 'u32[]', space=smem, size = 0x4, offset = 0x4, fixed_abs, tag = 'smem constant byte address 0x4 - core index']
  #allocation1 [shape = 'u32[144,128]{1,0:T(1,128)}', space=vmem, size = 0x12000, scoped, tag = 'internal scratch']
  #allocation2 [shape = 'f32[16,256]{1,0:T(8,128)}', space=vmem, size = 0x4000, scoped, tag = 'scratch operand']
  %s0 = inlined_call_operand.hbm [shape: f32[16,32], index: 0, kind: input, shape index: {}]
  %s1 = inlined_call_operand.hbm [shape: f32[32,256], index: 1, kind: input, shape index: {}]
  %s2 = inlined_call_operand.hbm [shape: f32[16,128], index: 2, kind: output, shape index: {}]
  %s3 = sld [smem:[#allocation0]]
  $region34: #{tpu_custom_call.1} parent=0
    _
  %s5 = ssub.s32 1, %s3
  %s6 = scalar_select 0, %s5, %s3
  $region1: #{tpu_custom_call.1} parent=0
    #allocation3 [shape = 'u8[8192]{0}', space=vmem, size = 0x2000, scoped, tag = 'input window, operand 0, single buffered']
    #allocation4 [shape = 's32[1]{0}', space=sflag, size = 0x4, scoped, tag = 'scoped memory for tpu_custom_call.1']
    #allocation5 [shape = 's32[1]{0}', space=sflag, size = 0x4, scoped, tag = 'scoped memory for tpu_custom_call.1']
    #allocation6 [shape = 'u8[32768]{0}', space=vmem, size = 0x8000, scoped, tag = 'input window, operand 1, single buffered']
    #allocation7 [shape = 's32[1]{0}', space=sflag, size = 0x4, scoped, tag = 'scoped memory for tpu_custom_call.1']
    #allocation8 [shape = 'u8[8192]{0}', space=vmem, size = 0x2000, scoped, tag = 'output window, operand 0, single buffered']
    %7 = vsyncpa [#allocation4], 0
    %8 = vsyncpa [#allocation7], 0
    %9 = vsyncpa [#allocation5], 0
    // Predicated region
    $region2: #{tpu_custom_call.1} parent=1 // pred_check
      _
    $region3: #{tpu_custom_call.1} parent=1 // pred_check_branch
      %11 = sbr.rel (0) target = $region5
    $region4: #{tpu_custom_call.1} parent=1 // pred_region
      %s13 = ssub.s32 256, 256
      %14 = vsyncadd [#allocation4], %s13
      %s15 = sshll.u32 [#allocation3], 4
      %s16 = int_to_ptr.vmem [resolvable:$true] %s15
      %21 = dma.hbm_to_vmem [thread:$0]  %s0, 256, %s16, [#allocation4], 128, 128, 8
    $region5: #{tpu_custom_call.1} parent=1 // pred_fallthru
      _
    // Predicated region
    $region6: #{tpu_custom_call.1} parent=1 // pred_check
      _
    $region7: #{tpu_custom_call.1} parent=1 // pred_check_branch
      %23 = sbr.rel (0) target = $region9
    $region8: #{tpu_custom_call.1} parent=1 // pred_region
      %s25 = ssub.s32 1024, 1024
      %26 = vsyncadd [#allocation7], %s25
      %s27 = sshll.u32 [#allocation6], 4
      %s28 = int_to_ptr.vmem [resolvable:$true] %s27
      %33 = dma.hbm_to_vmem [thread:$0]  %s1, 1024, %s28, [#allocation7], 256, 256, 16
    $region9: #{tpu_custom_call.1} parent=1 // pred_fallthru
      _
    // Predicated region
    $region10: #{tpu_custom_call.1} parent=1 // pred_check
      _
    $region11: #{tpu_custom_call.1} parent=1 // pred_check_branch
      %35 = sbr.rel (0) target = $region13
    $region12: #{tpu_custom_call.1} parent=1 // pred_region
      %36 = dma.done [#allocation4], 256
    $region13: #{tpu_custom_call.1} parent=1 // pred_fallthru
      _
    // Predicated region
    $region14: #{tpu_custom_call.1} parent=1 // pred_check
      _
    $region15: #{tpu_custom_call.1} parent=1 // pred_check_branch
      %38 = sbr.rel (0) target = $region17
    $region16: #{tpu_custom_call.1} parent=1 // pred_region
      %39 = dma.done [#allocation7], 1024
    $region17: #{tpu_custom_call.1} parent=1 // pred_fallthru
      _
    %p40 = scmp.eq.s32.totalorder 0, 0
    // Predicated region
    $region18: #{tpu_custom_call.1} parent=1 // pred_check
      %p41 = pneg %p40
    $region19: #{tpu_custom_call.1} parent=1 // pred_check_branch
      %43 = sbr.rel (%p41) target = $region21
    $region20: #{tpu_custom_call.1} parent=1 // pred_region
      %44 = vst [vmem:[#allocation2] sm:$0xff] 0.0
      %45 = vst [vmem:[#allocation2 + $0x8] sm:$0xff] 0.0
      %46 = vst [vmem:[#allocation2 + $0x10] sm:$0xff] 0.0
      %47 = vst [vmem:[#allocation2 + $0x18] sm:$0xff] 0.0
    $region21: #{tpu_custom_call.1} parent=1 // pred_fallthru
      _
    %v48 = vld [vmem:[#allocation2] sm:$0xff]
    %v49 = vld [vmem:[#allocation2 + $0x8] sm:$0xff]
    %v50 = vld [vmem:[#allocation2 + $0x10] sm:$0xff]
    %v51 = vld [vmem:[#allocation2 + $0x18] sm:$0xff]
    %v52 = vld [vmem:[#allocation3] sm:$0xff]
    %v53 = vld [vmem:[#allocation3 + $0x8] sm:$0xff]
    %v54 = vld [vmem:[#allocation6] sm:$0xff]
    %v55 = vld [vmem:[#allocation6 + $0x8] sm:$0xff]
    %v56 = vld [vmem:[#allocation6 + $0x10] sm:$0xff]
    %v57 = vld [vmem:[#allocation6 + $0x18] sm:$0xff]
    %v58 = vld [vmem:[#allocation6 + $0x20] sm:$0xff]
    %v59 = vld [vmem:[#allocation6 + $0x28] sm:$0xff]
    %v60 = vld [vmem:[#allocation6 + $0x30] sm:$0xff]
    %v61 = vld [vmem:[#allocation6 + $0x38] sm:$0xff]
    %vm62 = vcmask 261120
    %v64 = vsel %vm62, %v52, 0
    %v67 = vsel %vm62, %v53, 0
    %69 = vmatprep.subr.mxu0 %v55
    %70 = vmatpush1.msra.mxu0 %v54
    %71 = vmatprep.subr.mxu0 %v57
    %72 = vmatpush1.msra.mxu0 %v56
    %73 = vmatprep.subr.mxu0 %v59
    %74 = vmatpush1.msra.mxu0 %v58
    %75 = vmatprep.subr.mxu0 %v61
    %76 = vmatpush1.msra.mxu0 %v60
    %77 = vmatprep.subr.mxu0 0.0
    %78 = vmatpush1.msra.mxu0 0.0
    %79 = vmatprep.subr.mxu0 0.0
    %80 = vmatpush1.msra.mxu0 0.0
    %81 = vmatprep.subr.mxu0 0.0
    %82 = vmatpush1.msra.mxu0 0.0
    %83 = vmatprep.subr.mxu0 0.0
    %84 = vmatpush1.msra.mxu0 0.0
    %85 = vmatprep.subr.mxu0 0.0
    %86 = vmatpush1.msra.mxu0 0.0
    %87 = vmatprep.subr.mxu0 0.0
    %88 = vmatpush1.msra.mxu0 0.0
    %89 = vmatprep.subr.mxu0 0.0
    %90 = vmatpush1.msra.mxu0 0.0
    %91 = vmatprep.subr.mxu0 0.0
    %92 = vmatpush1.msra.mxu0 0.0
    %93 = vmatprep.subr.mxu0 0.0
    %94 = vmatpush1.msra.mxu0 0.0
    %95 = vmatprep.subr.mxu0 0.0
    %96 = vmatpush1.msra.mxu0 0.0
    %97 = vmatprep.subr.mxu0 0.0
    %98 = vmatpush1.msra.mxu0 0.0
    %99 = vmatprep.subr.mxu0 0.0
    %100 = vmatpush1.msra.mxu0 0.0
    %101 = vmatprep.subr.mxu0 0.0
    %102 = vmatpush1.msra.mxu0 0.0
    %103 = vmatprep.subr.mxu0 0.0
    %104 = vmatpush1.msra.mxu0 0.0
    %105 = vmatprep.subr.mxu0 0.0
    %106 = vmatpush1.msra.mxu0 0.0
    %107 = vmatprep.subr.mxu0 0.0
    %108 = vmatpush1.msra.mxu0 0.0
    %109 = vmatprep.subr.mxu0 0.0
    %110 = vmatpush1.msra.mxu0 0.0
    %111 = vmatprep.subr.mxu0 0.0
    %112 = vmatpush1.msra.mxu0 0.0
    %113 = vmatprep.subr.mxu0 0.0
    %114 = vmatpush1.msra.mxu0 0.0
    %115 = vmatprep.subr.mxu0 0.0
    %116 = vmatpush1.msra.mxu0 0.0
    %117 = vmatprep.subr.mxu0 0.0
    %118 = vmatpush1.msra.mxu0 0.0
    %119 = vmatprep.subr.mxu0 0.0
    %120 = vmatpush1.msra.mxu0 0.0
    %121 = vmatprep.subr.mxu0 0.0
    %122 = vmatpush1.msra.mxu0 0.0
    %123 = vmatprep.subr.mxu0 0.0
    %124 = vmatpush1.msra.mxu0 0.0
    %125 = vmatprep.subr.mxu0 0.0
    %126 = vmatpush1.msra.mxu0 0.0
    %127 = vmatprep.subr.mxu0 0.0
    %128 = vmatpush1.msra.mxu0 0.0
    %129 = vmatprep.subr.mxu0 0.0
    %130 = vmatpush1.msra.mxu0 0.0
    %131 = vmatprep.subr.mxu0 0.0
    %132 = vmatpush1.msra.mxu0 0.0
    %133 = vmatprep.mubr.f32.mxu0 0.0
    %134 = vmatmul.mubr.f32.gmra.mrb[0].mxu0 %v64
    %v135 = vpop.f32.mrb[0].mxu0
    %v136 = vadd.f32 0.0, %v135
    %v137 = vpop.f32.mrb[0].mxu0
    %v138 = vadd.f32 0.0, %v137
    %139 = vmatprep.mubr.f32.mxu0 0.0
    %140 = vmatmul.mubr.f32.gmra.mrb[0].mxu0 %v67
    %v141 = vpop.f32.mrb[0].mxu0
    %v142 = vadd.f32 0.0, %v141
    %v143 = vpop.f32.mrb[0].mxu0
    %v144 = vadd.f32 0.0, %v143
    %145 = vdwg.mxu0
    %v146 = vadd.f32 %v48, %v136
    %v147 = vadd.f32 %v49, %v138
    %v148 = vadd.f32 %v50, %v142
    %v149 = vadd.f32 %v51, %v144
    %150 = vst [vmem:[#allocation2] sm:$0xff] %v146
    %151 = vst [vmem:[#allocation2 + $0x8] sm:$0xff] %v147
    %152 = vst [vmem:[#allocation2 + $0x10] sm:$0xff] %v148
    %153 = vst [vmem:[#allocation2 + $0x18] sm:$0xff] %v149
    // Predicated region
    $region22: #{tpu_custom_call.1} parent=1 // pred_check
      %p154 = pneg %p40
    $region23: #{tpu_custom_call.1} parent=1 // pred_check_branch
      %156 = sbr.rel (%p154) target = $region25
    $region24: #{tpu_custom_call.1} parent=1 // pred_region
      %v157 = vld [vmem:[#allocation2] sm:$0xff]
      %v158 = vld [vmem:[#allocation2 + $0x8] sm:$0xff]
      %v159 = vld [vmem:[#allocation2 + $0x10] sm:$0xff]
      %v160 = vld [vmem:[#allocation2 + $0x18] sm:$0xff]
      %v161 = vmul.f32 %v157, 0.5
      %v162 = vmul.f32 %v159, 0.5
      %v163 = vmul.f32 %v157, 0.70710677
      %v164 = vmul.f32 %v159, 0.70710677
      %v165 = verf.f32.pop %v163
      %v166 = verf.f32.pop %v164
      %v167 = vadd.f32 %v165, 1.0
      %v168 = vadd.f32 %v166, 1.0
      %v169 = vmul.f32 %v161, %v167
      %v170 = vmul.f32 %v162, %v168
      %v171 = vmul.f32 %v158, 0.5
      %v172 = vmul.f32 %v160, 0.5
      %v173 = vtanh.pop %v171
      %v174 = vtanh.pop %v172
      %v175 = vadd.f32 %v173, 1.0
      %v176 = vadd.f32 %v174, 1.0
      %v177 = vmul.f32 %v175, 0.5
      %v178 = vmul.f32 %v176, 0.5
      %v179 = vmul.f32 %v169, %v177
      %v180 = vmul.f32 %v170, %v178
      %181 = vst [vmem:[#allocation8] sm:$0xff] %v179
      %182 = vst [vmem:[#allocation8 + $0x8] sm:$0xff] %v180
    $region25: #{tpu_custom_call.1} parent=1 // pred_fallthru
      _
    // Predicated region
    $region26: #{tpu_custom_call.1} parent=1 // pred_check
      _
    $region27: #{tpu_custom_call.1} parent=1 // pred_check_branch
      %184 = sbr.rel (0) target = $region29
    $region28: #{tpu_custom_call.1} parent=1 // pred_region
      %s186 = ssub.s32 256, 256
      %187 = vsyncadd [#allocation5], %s186
      %s188 = sshll.u32 [#allocation8], 4
      %s189 = int_to_ptr.vmem [resolvable:$true] %s188
      %194 = dma.vmem_to_hbm [thread:$0]  %s189, 256, %s2, [#allocation5], 128, 128, 8
    $region29: #{tpu_custom_call.1} parent=1 // pred_fallthru
      _
    // Predicated region
    $region30: #{tpu_custom_call.1} parent=1 // pred_check
      _
    $region31: #{tpu_custom_call.1} parent=1 // pred_check_branch
      %196 = sbr.rel (0) target = $region33
    $region32: #{tpu_custom_call.1} parent=1 // pred_region
      %197 = dma.done [#allocation5], 256
    $region33: #{tpu_custom_call.1} parent=1 // pred_fallthru
      _
    %198 = vsyncpa [#allocation4], 1
    %199 = vsyncpa [#allocation7], 1
    %200 = vsyncpa [#allocation5], 1

</llo_original>
